<compile_context>
chip_gen: v7x
topology: tpu7x:2x2x1
jax: 0.10.0
libtpu: 0.0.40
codegen_flags: <defaults>
</compile_context>

<pallas_src>
import functools

import jax
import jax.numpy as jnp
from jax import lax
from jax.experimental import pallas as pl
from jax.experimental.pallas import tpu as pltpu


def _focal_loss_kernel(gamma, n_valid, tile_n, x_ref, t_ref, a_ref, o_ref):
    i = pl.program_id(0)

    # Native-dtype contiguous block (TILE_N, C): cast to f32, then put the big
    # sample axis on the 128-lane axis with an in-VMEM transpose.
    x = x_ref[...].astype(jnp.float32)                               # (TILE_N, C)
    xt = x.T                                                         # (C, TILE_N)
    t = t_ref[...]                                                   # (1, TILE_N) i32
    a = a_ref[...]                                                   # (C, 1)      f32

    # Stable log-softmax select over the class (sublane) axis.
    m = jnp.max(xt, axis=0, keepdims=True)                           # (1, TILE_N)
    lse = jnp.log(jnp.sum(jnp.exp(xt - m), axis=0, keepdims=True))   # (1, TILE_N)

    # One-hot select via a boolean mask; iota is a cheap (C, 1) column.
    cls_ids = lax.broadcasted_iota(jnp.int32, (xt.shape[0], 1), 0)   # (C, 1)
    eq = cls_ids == t                                                # (C, TILE_N) bool

    logit_t = jnp.sum(jnp.where(eq, xt, 0.0), axis=0, keepdims=True)  # x[target]
    alpha_t = jnp.sum(jnp.where(eq, a, 0.0), axis=0, keepdims=True)   # alpha[target]

    log_p = (logit_t - m) - lse                                      # log softmax @ target
    probs = jnp.exp(log_p)
    q = 1.0 - probs

    g_int = int(gamma) if float(gamma) == int(gamma) else None
    if g_int is not None and 0 <= g_int <= 8:
        # Integer gamma: VPU multiply chain starting from q (gamma=2 -> q*q).
        pf = jnp.ones_like(q) if g_int == 0 else q
        for _ in range(max(g_int - 1, 0)):
            pf = pf * q
    else:
        pf = jnp.power(q, jnp.float32(gamma))

    loss_row = -alpha_t * pf * log_p                                 # (1, TILE_N)

    # Ragged tail: mask samples beyond the real batch (no host-side padding).
    col = i * tile_n + lax.broadcasted_iota(jnp.int32, loss_row.shape, 1)
    loss_row = jnp.where(col < n_valid, loss_row, 0.0)

    # Per-tile partial sum written to an aligned (1, 1, 128) lane row.
    tile_sum = jnp.sum(loss_row)
    o_ref[...] = jnp.zeros_like(o_ref) + tile_sum


def focal_loss(inputs, targets, alpha=None, gamma=2, size_average=True,
               tile_n=None):
    """inputs: (N, C) logits (any float dtype); targets: (N,) int class ids."""
    n, c = inputs.shape
    itemsize = jnp.dtype(inputs.dtype).itemsize

    if alpha is None:
        alpha_col = jnp.ones((c, 1), dtype=jnp.float32)   # torch.ones(class_num, 1)
    else:
        alpha_col = jnp.asarray(alpha, dtype=jnp.float32).reshape(c, 1)

    # Metadata-only reshape (no HBM copy): lane-dense target row.
    t_row = targets.astype(jnp.int32).reshape(1, n)

    # ---- tile sizing from the VMEM budget --------------------------------
    try:
        vmem_cap = int(pltpu.get_tpu_info().vmem_capacity_bytes)
    except Exception:
        vmem_cap = 64 * 1024 * 1024                       # conservative (v7x)
    vmem_limit = max(32 << 20, min(vmem_cap * 3 // 4, 64 << 20))

    c_pad = ((c + 7) // 8) * 8
    # Approx bytes per sample column in the live working set:
    # 2x double-buffered native input block + ~6 f32 slab-sized temporaries.
    per_col = 2 * itemsize * c + 6 * 4 * c_pad
    target_block = (4 << 20) if vmem_cap > (64 << 20) else (2 << 20)
    tile_from_bytes = max(128, (target_block // max(itemsize * c, 1)) // 128 * 128)
    tile_from_vmem = max(128, ((vmem_limit // 2) // per_col) // 128 * 128)
    tile = min(tile_from_bytes, tile_from_vmem, 65536)
    if tile_n is not None:                                 # explicit override
        tile = max(128, (int(tile_n) // 128) * 128)
    if n <= tile:
        tile = n                                           # single full-batch tile

    n_tiles = pl.cdiv(n, tile)

    kernel = functools.partial(
        _focal_loss_kernel, float(gamma), int(n), int(tile))

    cost = pl.CostEstimate(
        flops=int(10 * n * c),
        transcendentals=int(n * c + 3 * n),
        bytes_accessed=int(itemsize * n * c + 4 * n + 4 * c + 512 * n_tiles),
    )

    partials = pl.pallas_call(
        kernel,
        out_shape=jax.ShapeDtypeStruct((n_tiles, 1, 128), jnp.float32),
        grid=(n_tiles,),
        in_specs=[
            pl.BlockSpec((tile, c), lambda i: (i, 0)),     # logits, native dtype
            pl.BlockSpec((1, tile), lambda i: (0, i)),     # targets (lane-dense)
            pl.BlockSpec((c, 1), lambda i: (0, 0)),        # alpha (resident)
        ],
        out_specs=pl.BlockSpec((1, 1, 128), lambda i: (i, 0, 0)),  # per-tile partials
        compiler_params=pltpu.CompilerParams(
            dimension_semantics=("parallel",),             # no carried accumulator
            vmem_limit_bytes=int(vmem_limit),
        ),
        cost_estimate=cost,
    )(inputs, t_row, alpha_col)

    total = jnp.sum(partials[:, 0, 0])
    if size_average:
        total = total / jnp.float32(n)
    return total


def _reference(inputs, targets, alpha, gamma=2, size_average=True):
    x = inputs.astype(jnp.float32)
    p = jax.nn.softmax(x, axis=1)
    _, c = x.shape
    mask = jax.nn.one_hot(targets, c, dtype=jnp.float32)
    probs = jnp.sum(p * mask, axis=1, keepdims=True)
    a = jnp.asarray(alpha, jnp.float32).reshape(-1)[targets].reshape(-1, 1)
    bl = -a * (1.0 - probs) ** gamma * jnp.log(probs)
    return jnp.mean(bl) if size_average else jnp.sum(bl)


if __name__ == "__main__":
    key = jax.random.PRNGKey(0)

    # Case 1: tiny f32 batch (default alpha=ones, gamma=2, mean reduction).
    k1, k2 = jax.random.split(key)
    N, C = 8, 4
    x1 = jax.random.normal(k1, (N, C), dtype=jnp.float32)
    t1 = jax.random.randint(k2, (N,), 0, C, dtype=jnp.int32)
    a1 = jnp.ones((C, 1), dtype=jnp.float32)
    out1 = focal_loss(x1, t1, alpha=a1, gamma=2, size_average=True)
    jax.block_until_ready(out1)
    ref1 = _reference(x1, t1, a1, gamma=2, size_average=True)
    assert jnp.allclose(out1, ref1, rtol=1e-5, atol=1e-5), (out1, ref1)

    # Case 2: bf16 logits, multi-tile grid with ragged tail (forced tile=128),
    # non-uniform alpha, sum reduction — exercises native-dtype ingest + mask.
    k3, k4, k5 = jax.random.split(k1, 3)
    N2, C2 = 300, 4
    x2 = jax.random.normal(k3, (N2, C2), dtype=jnp.float32).astype(jnp.bfloat16)
    t2 = jax.random.randint(k4, (N2,), 0, C2, dtype=jnp.int32)
    a2 = jax.random.uniform(k5, (C2, 1), dtype=jnp.float32, minval=0.25, maxval=1.0)
    out2 = focal_loss(x2, t2, alpha=a2, gamma=2, size_average=False, tile_n=128)
    jax.block_until_ready(out2)
    ref2 = _reference(x2.astype(jnp.float32), t2, a2, gamma=2, size_average=False)
    assert jnp.allclose(out2, ref2, rtol=5e-3, atol=5e-3), (out2, ref2)

    print("KERNEL_OK")
</pallas_src>

<mosaic_0001>
module attributes {stable_mosaic.version = 11 : i64} {
  func.func @_focal_loss_kernel(%arg0: i32, %arg1: memref<8x4xf32, #tpu.memory_space<vmem>>, %arg2: memref<1x8xi32, #tpu.memory_space<vmem>>, %arg3: memref<4x1xf32, #tpu.memory_space<vmem>>, %arg4: memref<1x1x128xf32, #tpu.memory_space<vmem>>) attributes {dimension_semantics = [#tpu.dimension_semantics<parallel>], iteration_bounds = array<i64: 1>, scalar_prefetch = 0 : i64, scratch_operands = 0 : i64, tpu.core_type = #tpu.core_type<tc>, window_params = [{transform_indices = @transform_0, window_bounds = array<i64: 8, 4>}, {transform_indices = @transform_1, window_bounds = array<i64: 1, 8>}, {pipeline_mode = #tpu.pipeline_mode<synchronous>, transform_indices = @transform_2, window_bounds = array<i64: 4, 1>}, {transform_indices = @transform_3, window_bounds = array<i64: 1, 1, 128>}]} {
    %c0 = arith.constant 0 : index
    %c0_0 = arith.constant 0 : index
    %0 = vector.load %arg1[%c0, %c0_0] : memref<8x4xf32, #tpu.memory_space<vmem>>, vector<8x4xf32>
    %1 = tpu.transpose %0, [1, 0] : vector<8x4xf32> -> vector<4x8xf32>
    %c0_1 = arith.constant 0 : index
    %c0_2 = arith.constant 0 : index
    %2 = vector.load %arg2[%c0_1, %c0_2] : memref<1x8xi32, #tpu.memory_space<vmem>>, vector<1x8xi32>
    %c0_3 = arith.constant 0 : index
    %c0_4 = arith.constant 0 : index
    %3 = vector.load %arg3[%c0_3, %c0_4] : memref<4x1xf32, #tpu.memory_space<vmem>>, vector<4x1xf32>
    %cst = arith.constant dense<0xFF800000> : vector<8xf32>
    %4 = vector.multi_reduction <maximumf>, %1, %cst [0] : vector<4x8xf32> to vector<8xf32>
    %5 = vector.shape_cast %4 : vector<8xf32> to vector<1x8xf32>
    %6 = vector.broadcast %5 : vector<1x8xf32> to vector<4x8xf32>
    %7 = arith.subf %1, %6 : vector<4x8xf32>
    %8 = math.exp %7 : vector<4x8xf32>
    %cst_5 = arith.constant dense<0.000000e+00> : vector<8xf32>
    %9 = vector.multi_reduction <add>, %8, %cst_5 [0] : vector<4x8xf32> to vector<8xf32>
    %10 = vector.shape_cast %9 : vector<8xf32> to vector<1x8xf32>
    %11 = math.log %10 : vector<1x8xf32>
    %12 = tpu.iota {dimensions = array<i32: 0>} : vector<4x1xi32>
    %13 = vector.broadcast %12 : vector<4x1xi32> to vector<4x8xi32>
    %14 = vector.broadcast %2 : vector<1x8xi32> to vector<4x8xi32>
    %15 = arith.cmpi eq, %13, %14 : vector<4x8xi32>
    %cst_6 = arith.constant 0.000000e+00 : f32
    %16 = vector.broadcast %cst_6 : f32 to vector<4x8xf32>
    %17 = arith.select %15, %1, %16 : vector<4x8xi1>, vector<4x8xf32>
    %cst_7 = arith.constant dense<0.000000e+00> : vector<8xf32>
    %18 = vector.multi_reduction <add>, %17, %cst_7 [0] : vector<4x8xf32> to vector<8xf32>
    %19 = vector.shape_cast %18 : vector<8xf32> to vector<1x8xf32>
    %cst_8 = arith.constant 0.000000e+00 : f32
    %20 = vector.shape_cast %3 : vector<4x1xf32> to vector<4x1xf32>
    %21 = vector.broadcast %20 : vector<4x1xf32> to vector<4x8xf32>
    %22 = vector.broadcast %cst_8 : f32 to vector<4x8xf32>
    %23 = arith.select %15, %21, %22 : vector<4x8xi1>, vector<4x8xf32>
    %cst_9 = arith.constant dense<0.000000e+00> : vector<8xf32>
    %24 = vector.multi_reduction <add>, %23, %cst_9 [0] : vector<4x8xf32> to vector<8xf32>
    %25 = vector.shape_cast %24 : vector<8xf32> to vector<1x8xf32>
    %26 = arith.subf %19, %5 : vector<1x8xf32>
    %27 = arith.subf %26, %11 : vector<1x8xf32>
    %28 = math.exp %27 : vector<1x8xf32>
    %cst_10 = arith.constant 1.000000e+00 : f32
    %29 = vector.broadcast %cst_10 : f32 to vector<1x8xf32>
    %30 = arith.subf %29, %28 : vector<1x8xf32>
    %31 = arith.mulf %30, %30 : vector<1x8xf32>
    %cst_11 = arith.constant 0.000000e+00 : f32
    %32 = vector.broadcast %cst_11 : f32 to vector<1x8xf32>
    %33 = arith.subf %32, %25 : vector<1x8xf32>
    %34 = arith.mulf %33, %31 : vector<1x8xf32>
    %35 = arith.mulf %34, %27 : vector<1x8xf32>
    %c8_i32 = arith.constant 8 : i32
    %36 = arith.muli %arg0, %c8_i32 : i32
    %37 = tpu.iota {dimensions = array<i32: 1>} : vector<1x8xi32>
    %38 = vector.broadcast %36 : i32 to vector<1x8xi32>
    %39 = arith.addi %38, %37 : vector<1x8xi32>
    %c8_i32_12 = arith.constant 8 : i32
    %40 = vector.broadcast %c8_i32_12 : i32 to vector<1x8xi32>
    %41 = arith.cmpi slt, %39, %40 : vector<1x8xi32>
    %cst_13 = arith.constant 0.000000e+00 : f32
    %42 = vector.broadcast %cst_13 : f32 to vector<1x8xf32>
    %43 = arith.select %41, %35, %42 : vector<1x8xi1>, vector<1x8xf32>
    %44 = vector.shape_cast %43 : vector<1x8xf32> to vector<1x1x8xf32>
    %cst_14 = arith.constant dense<0.000000e+00> : vector<1xf32>
    %45 = vector.multi_reduction <add>, %44, %cst_14 [1, 2] : vector<1x1x8xf32> to vector<1xf32>
    %46 = vector.shape_cast %45 : vector<1xf32> to vector<1x1x1xf32>
    %47 = vector.extract %46[0, 0, 0] : f32 from vector<1x1x1xf32>
    %cst_15 = arith.constant 0.000000e+00 : f32
    %48 = vector.broadcast %cst_15 : f32 to vector<1x1x128xf32>
    %49 = vector.broadcast %47 : f32 to vector<1x1x128xf32>
    %50 = arith.addf %48, %49 : vector<1x1x128xf32>
    %c0_16 = arith.constant 0 : index
    %c0_17 = arith.constant 0 : index
    %c0_18 = arith.constant 0 : index
    %51 = vector.load %arg4[%c0_16, %c0_17, %c0_18] : memref<1x1x128xf32, #tpu.memory_space<vmem>>, vector<1x1x128xf32>
    tpu.vector_store %arg4[%c0_16, %c0_17, %c0_18], %50 {strides = array<i32>} : memref<1x1x128xf32, #tpu.memory_space<vmem>>, vector<1x1x128xf32>,
    return
  }
  func.func @transform_0(%arg0: i32) -> (i32, i32) {
    %c0_i32 = arith.constant 0 : i32
    %c0_i32_0 = arith.constant 0 : i32
    return %arg0, %c0_i32 : i32, i32
  }
  func.func @transform_1(%arg0: i32) -> (i32, i32) {
    %c0_i32 = arith.constant 0 : i32
    %c0_i32_0 = arith.constant 0 : i32
    return %c0_i32, %arg0 : i32, i32
  }
  func.func @transform_2(%arg0: i32) -> (i32, i32) {
    %c0_i32 = arith.constant 0 : i32
    %c0_i32_0 = arith.constant 0 : i32
    %c0_i32_1 = arith.constant 0 : i32
    return %c0_i32, %c0_i32_0 : i32, i32
  }
  func.func @transform_3(%arg0: i32) -> (i32, i32, i32) {
    %c0_i32 = arith.constant 0 : i32
    %c0_i32_0 = arith.constant 0 : i32
    %c0_i32_1 = arith.constant 0 : i32
    return %arg0, %c0_i32, %c0_i32_0 : i32, i32, i32
  }
}

</mosaic_0001>

<llo_original>
// kernel: tpu_custom_call.1
$region0: #{tpu_custom_call.1}
  #allocation0 [shape = 'u32[]', space=smem, size = 0x4, offset = 0x4, fixed_abs, tag = 'smem constant byte address 0x4 - core index']
  #allocation1 [shape = 'u32[144,128]{1,0:T(1,128)}', space=vmem, size = 0x12000, scoped, tag = 'internal scratch']
  %s0 = inlined_call_operand.vmem [shape: f32[8,4], index: 0, kind: input, shape index: {}]
  %s1 = inlined_call_operand.vmem [shape: s32[1,8], index: 1, kind: input, shape index: {}]
  %s2 = inlined_call_operand.vmem [shape: f32[4,1], index: 2, kind: input, shape index: {}]
  %s3 = inlined_call_operand.hbm [shape: f32[1,1,128], index: 3, kind: output, shape index: {}]
  %s4 = sld [smem:[#allocation0]]
  $region22: #{tpu_custom_call.1} parent=0
    _
  %s6 = ssub.s32 1, %s4
  %s7 = scalar_select 0, %s6, %s4
  $region1: #{tpu_custom_call.1} parent=0
    #allocation2 [shape = 'u8[512]{0}', space=vmem, size = 0x400, scoped, tag = 'output window, operand 0, single buffered']
    #allocation3 [shape = 's32[1]{0}', space=sflag, size = 0x4, scoped, tag = 'scoped memory for tpu_custom_call.1']
    %8 = vsyncpa [#allocation3], 0
    // Predicated region
    $region2: #{tpu_custom_call.1} parent=1 // pred_check
      _
    $region3: #{tpu_custom_call.1} parent=1 // pred_check_branch
      %10 = sbr.rel (0) target = $region5
    $region4: #{tpu_custom_call.1} parent=1 // pred_region
      _
    $region5: #{tpu_custom_call.1} parent=1 // pred_fallthru
      _
    // Predicated region
    $region6: #{tpu_custom_call.1} parent=1 // pred_check
      _
    $region7: #{tpu_custom_call.1} parent=1 // pred_check_branch
      %12 = sbr.rel (0) target = $region9
    $region8: #{tpu_custom_call.1} parent=1 // pred_region
      _
    $region9: #{tpu_custom_call.1} parent=1 // pred_fallthru
      _
    // Predicated region
    $region10: #{tpu_custom_call.1} parent=1 // pred_check
      _
    $region11: #{tpu_custom_call.1} parent=1 // pred_check_branch
      %14 = sbr.rel (0) target = $region13
    $region12: #{tpu_custom_call.1} parent=1 // pred_region
      _
    $region13: #{tpu_custom_call.1} parent=1 // pred_fallthru
      _
    %v15 = vld [vmem:[%s0] sm:$0xff]
    %16 = vxpose.xlu0.b32.start [1/16] %v15, 128
    %17 = vxpose.xlu0.b32.cont [2/16] 0.0, 128
    %18 = vxpose.xlu0.b32.cont [3/16] 0.0, 128
    %19 = vxpose.xlu0.b32.cont [4/16] 0.0, 128
    %20 = vxpose.xlu0.b32.cont [5/16] 0.0, 128
    %21 = vxpose.xlu0.b32.cont [6/16] 0.0, 128
    %22 = vxpose.xlu0.b32.cont [7/16] 0.0, 128
    %23 = vxpose.xlu0.b32.cont [8/16] 0.0, 128
    %24 = vxpose.xlu0.b32.cont [9/16] 0.0, 128
    %25 = vxpose.xlu0.b32.cont [10/16] 0.0, 128
    %26 = vxpose.xlu0.b32.cont [11/16] 0.0, 128
    %27 = vxpose.xlu0.b32.cont [12/16] 0.0, 128
    %28 = vxpose.xlu0.b32.cont [13/16] 0.0, 128
    %29 = vxpose.xlu0.b32.cont [14/16] 0.0, 128
    %30 = vxpose.xlu0.b32.cont [15/16] 0.0, 128
    %31 = vxpose.xlu0.b32.end [16/16] 0.0, 128
    %v32 = vpop.trf.xlu0
    %v33 = vpop.trf.xlu0
    %v34 = vpop.trf.xlu0
    %v35 = vpop.trf.xlu0
    %v36 = vpop.trf.xlu0
    %v37 = vpop.trf.xlu0
    %v38 = vpop.trf.xlu0
    %v39 = vpop.trf.xlu0
    %v40 = vpop.trf.xlu0
    %v41 = vpop.trf.xlu0
    %v42 = vpop.trf.xlu0
    %v43 = vpop.trf.xlu0
    %v44 = vpop.trf.xlu0
    %v45 = vpop.trf.xlu0
    %v46 = vpop.trf.xlu0
    %v47 = vpop.trf.xlu0
    %v48 = vld [vmem:[%s1] sm:$0x1]
    %v49 = vld [vmem:[%s2] sm:$0xf]
    %vm50 = vcmask 60416
    %v51 = vsel %vm50, %v32, -inf
    %v52 = vrot.slane %v51, 4
    %v53 = vmax.f32 %v51, %v52
    %v54 = vrot.slane %v53, 2
    %v55 = vmax.f32 %v53, %v54
    %v56 = vrot.slane %v55, 1
    %v57 = vmax.f32 %v55, %v56
    %v58 = vsub.f32 %v32, %v57
    %v59 = vmul.f32 %v58, 1.442695
    %v60 = vpow.pop %v59
    %v61 = vsel %vm50, %v60, 0.0
    %v62 = vrot.slane %v61, 4
    %v63 = vadd.f32 %v61, %v62
    %v64 = vrot.slane %v63, 2
    %v65 = vadd.f32 %v63, %v64
    %v66 = vrot.slane %v65, 1
    %v67 = vadd.f32 %v65, %v66
    %v68 = vlog2.pop %v67
    %v69 = vmul.f32 %v68, 0.6931472
    %v70 = vlaneseq
    %v71 = vshrl.u32 %v70, 7
    %v72 = vlaneseq
    %v73 = vshrl.u32 %v72, 7
    %v74 = vsub.s32 0, %v73
    %v75 = vrot.slane %v48, %v74
    %vm76 = vcmp.eq.s32.totalorder %v71, %v75
    %v77 = vsel %vm76, %v32, 0.0
    %v78 = vsel %vm50, %v77, 0.0
    %v79 = vrot.slane %v78, 4
    %v80 = vadd.f32 %v78, %v79
    %v81 = vrot.slane %v80, 2
    %v82 = vadd.f32 %v80, %v81
    %v83 = vrot.slane %v82, 1
    %v84 = vadd.f32 %v82, %v83
    %86 = vset.pattern.permute.xlu0 0
    %87 = vperm.xlu0 %86, %v49
    %v88 = vpop.permute.xlu0 %87
    %v90 = vsel %vm76, %v88, 0.0
    %v91 = vsel %vm50, %v90, 0.0
    %v92 = vrot.slane %v91, 4
    %v93 = vadd.f32 %v91, %v92
    %v94 = vrot.slane %v93, 2
    %v95 = vadd.f32 %v93, %v94
    %v96 = vrot.slane %v95, 1
    %v97 = vadd.f32 %v95, %v96
    %v98 = vsub.f32 %v84, %v57
    %v99 = vsub.f32 %v98, %v69
    %v100 = vmul.f32 %v99, 1.442695
    %v101 = vpow.pop %v100
    %v102 = vsub.f32 1.0, %v101
    %v103 = vmul.f32 %v102, %v102
    %v104 = vsub.f32 0.0, %v97
    %v105 = vmul.f32 %v104, %v103
    %v106 = vmul.f32 %v105, %v99
    %s107 = smul.u32 0, 8
    %v108 = vlaneseq
    %v109 = vand.u32 %v108, 127
    %v110 = vstv %s107
    %v111 = vadd.s32 %v110, %v109
    %vm112 = vcmp.lt.s32.totalorder %v111, 8
    %v113 = vsel %vm112, %v106, 0.0
    %vm114 = vcmask 57344
    %v115 = vsel %vm114, %v113, 0.0
    %116 = vadd.xlane.f32.xlu0 %v115
    %v117 = vpop.xlane.xlu0 %116
    %v118 = vrot.slane %v117, 4
    %v119 = vadd.f32 %v117, %v118
    %v120 = vrot.slane %v119, 2
    %v121 = vadd.f32 %v119, %v120
    %v122 = vrot.slane %v121, 1
    %v123 = vadd.f32 %v121, %v122
    %s124 = vtos %v123
    %v125 = vstv %s124
    %v126 = vadd.f32 %v125, 0.0
    %127 = vst [vmem:[#allocation2] sm:$0x1] %v126
    // Predicated region
    $region14: #{tpu_custom_call.1} parent=1 // pred_check
      _
    $region15: #{tpu_custom_call.1} parent=1 // pred_check_branch
      %129 = sbr.rel (0) target = $region17
    $region16: #{tpu_custom_call.1} parent=1 // pred_region
      %s131 = ssub.s32 16, 16
      %132 = vsyncadd [#allocation3], %s131
      %s134 = sshll.u32 [#allocation2], 4
      %s135 = int_to_ptr.vmem [resolvable:$true] %s134
      %137 = dma.vmem_to_hbm [thread:$0]  %s135, 16, %s3, [#allocation3]
    $region17: #{tpu_custom_call.1} parent=1 // pred_fallthru
      _
    // Predicated region
    $region18: #{tpu_custom_call.1} parent=1 // pred_check
      _
    $region19: #{tpu_custom_call.1} parent=1 // pred_check_branch
      %139 = sbr.rel (0) target = $region21
    $region20: #{tpu_custom_call.1} parent=1 // pred_region
      %140 = dma.done [#allocation3], 16
    $region21: #{tpu_custom_call.1} parent=1 // pred_fallthru
      _
    %141 = vsyncpa [#allocation3], 1

</llo_original>
